<compile_context>
chip_gen: v7x
topology: tpu7x:2x2x1
jax: 0.10.0
libtpu: 0.0.40
codegen_flags: <defaults>
</compile_context>

<pallas_src>
import functools
import math

import jax
import jax.numpy as jnp
from jax.experimental import pallas as pl
from jax.experimental.pallas import tpu as pltpu


def _round_up(x, m):
    return ((x + m - 1) // m) * m


def _sublane_multiple(dtype):
    # f32 -> 8, bf16 -> 16 (sub-32-bit dtypes pack along sublanes).
    return max(8, 32 // jnp.dtype(dtype).itemsize)


def _quick_gelu(x, *, approx):
    """x * sigmoid(1.702 * x).

    The sigmoid core (exp, reciprocal) is evaluated in f32 on the EUP (numerically
    stable: exp of a non-positive argument only); the outer multiply stays in x.dtype
    so a bf16 epilogue keeps its reduced VALU width.
    """
    zf = (1.702 * x).astype(jnp.float32)
    e = jnp.exp(-jnp.abs(zf))                                   # EUP
    num = jnp.where(zf >= 0.0, 1.0, e)
    if approx:
        sig = num * pl.reciprocal(1.0 + e, approx=True)         # EUP vrcp, no Newton step
    else:
        sig = num / (1.0 + e)
    return x * sig.astype(x.dtype)


def _layer_norm_f32(x, gamma, beta, eps=1e-5):
    # PyTorch nn.LayerNorm semantics (biased variance, eps inside sqrt), computed in f32
    # regardless of input dtype (matches the fp16-safe LayerNorm subclass).
    xf = x.astype(jnp.float32)
    mean = jnp.mean(xf, axis=-1, keepdims=True)
    c = xf - mean
    var = jnp.mean(c * c, axis=-1, keepdims=True)
    return c * jax.lax.rsqrt(var + eps) * gamma + beta


def _build_kernel(matmul_dtype, epilogue_dtype, approx_recip):
    def kernel(x_ref, g1_ref, b1_ref, w1_ref, c1_ref,
               g2_ref, b2_ref, w2_ref, c2_ref, o_ref):
        x = x_ref[...]                                           # (TP, D) in I/O dtype

        # down_project: LayerNorm(d_model) -> Linear(d_model, hidden) -> QuickGELU
        h = _layer_norm_f32(x, g1_ref[...], b1_ref[...])         # f32
        h = jnp.dot(h.astype(matmul_dtype), w1_ref[...],
                    preferred_element_type=jnp.float32)          # (TP, Hd) MXU, f32 acc
        h = h.astype(epilogue_dtype) + c1_ref[...].astype(epilogue_dtype)
        h = _quick_gelu(h, approx=approx_recip)

        # up_project: LayerNorm(hidden) -> Linear(hidden, d_model) -> QuickGELU
        y = _layer_norm_f32(h, g2_ref[...], b2_ref[...])         # f32
        y = jnp.dot(y.astype(matmul_dtype), w2_ref[...],
                    preferred_element_type=jnp.float32)          # (TP, D)
        y = y.astype(epilogue_dtype) + c2_ref[...].astype(epilogue_dtype)
        y = _quick_gelu(y, approx=approx_recip)

        # residual add
        o_ref[...] = (y + x.astype(epilogue_dtype)).astype(o_ref.dtype)

    return kernel


def _default_tiling():
    """Generation-aware (tile_p, vmem_limit_bytes)."""
    vmem_cap = 128 * 1024 * 1024
    try:
        vmem_cap = int(pltpu.get_tpu_info().vmem_capacity_bytes)
    except Exception:
        pass
    if vmem_cap <= 80 * 1024 * 1024:          # v7x: 64 MiB per TensorCore
        return 512, 36 * 1024 * 1024
    return 1024, 48 * 1024 * 1024             # v5e / v6e: 128 MiB


def vit_residual_adapter(x, ln1_g, ln1_b, w_down, b_down,
                         ln2_g, ln2_b, w_up, b_up, *,
                         tile_p=None, strict=False, epilogue_dtype=None,
                         donate_input=False):
    """x: (..., d_model).  w_down: (d_model, hidden) = PyTorch weight.T,
    w_up: (hidden, d_model) = PyTorch weight.T.  ln*_g/ln*_b/b_*: 1-D per-channel vectors.

    strict=True     -> pure-f32 matmuls, exact divide in QuickGELU, f32 epilogue.
    epilogue_dtype  -> override the bias/GELU/residual compute dtype (default: f32 when
                       strict, otherwise x.dtype; force f32 on v5e for bf16 I/O).
    donate_input    -> alias the output onto x (only if the caller donates x and no
                       row padding is needed).
    """
    *lead, D = x.shape
    Hd = w_down.shape[-1]
    assert w_down.shape == (D, Hd) and w_up.shape == (Hd, D)

    matmul_dtype = jnp.float32 if strict else jnp.bfloat16
    if epilogue_dtype is None:
        epilogue_dtype = jnp.float32 if strict else x.dtype
    epilogue_dtype = jnp.dtype(epilogue_dtype)
    approx_recip = not strict

    default_tile, vmem_limit = _default_tiling()
    if tile_p is None:
        tile_p = default_tile

    P = math.prod(lead) if lead else 1
    x2d = x.reshape(P, D)                      # channel-last already: no transpose

    # Big tiles (mem-bound), but aim for ~8 grid steps (>=4 per TC on v7x megacore)
    # so the double-buffered DMA pipeline overlaps; round to the dtype sublane multiple.
    sub = _sublane_multiple(x.dtype)
    tile_p = max(sub, min(int(tile_p), _round_up(pl.cdiv(P, 8), sub)))
    P_pad = _round_up(P, tile_p)
    padded = P_pad != P
    if padded:
        x2d = jnp.pad(x2d, ((0, P_pad - P), (0, 0)))

    f32 = jnp.float32
    row = lambda v, dt: v.reshape(1, -1).astype(dt)
    bcast = lambda i: (0, 0)
    grid = (P_pad // tile_p,)

    kernel = _build_kernel(matmul_dtype, epilogue_dtype, approx_recip)
    aliases = {0: 0} if (donate_input and not padded) else {}

    out2d = pl.pallas_call(
        kernel,
        out_shape=jax.ShapeDtypeStruct((P_pad, D), x.dtype),
        grid_spec=pltpu.PrefetchScalarGridSpec(
            num_scalar_prefetch=0,
            grid=grid,
            in_specs=[
                pl.BlockSpec((tile_p, D), lambda i: (i, 0)),   # x tile
                pl.BlockSpec((1, D), bcast),                   # LN1 gamma (f32)
                pl.BlockSpec((1, D), bcast),                   # LN1 beta  (f32)
                pl.BlockSpec((D, Hd), bcast),                  # W_down^T (matmul dtype)
                pl.BlockSpec((1, Hd), bcast),                  # b_down   (f32)
                pl.BlockSpec((1, Hd), bcast),                  # LN2 gamma
                pl.BlockSpec((1, Hd), bcast),                  # LN2 beta
                pl.BlockSpec((Hd, D), bcast),                  # W_up^T   (matmul dtype)
                pl.BlockSpec((1, D), bcast),                   # b_up     (f32)
            ],
            out_specs=pl.BlockSpec((tile_p, D), lambda i: (i, 0)),
        ),
        compiler_params=pltpu.CompilerParams(
            dimension_semantics=("parallel",),
            vmem_limit_bytes=vmem_limit,
        ),
        input_output_aliases=aliases,
    )(x2d,
      row(ln1_g, f32), row(ln1_b, f32),
      w_down.astype(matmul_dtype), row(b_down, f32),
      row(ln2_g, f32), row(ln2_b, f32),
      w_up.astype(matmul_dtype), row(b_up, f32))

    if padded:
        out2d = out2d[:P]
    return out2d.reshape(*lead, D)


def _reference(x, ln1_g, ln1_b, w_down, b_down, ln2_g, ln2_b, w_up, b_up):
    f32 = jnp.float32
    xf = x.astype(f32)

    def ln(v, g, b, eps=1e-5):
        m = jnp.mean(v, -1, keepdims=True)
        c = v - m
        var = jnp.mean(c * c, -1, keepdims=True)
        return c * jax.lax.rsqrt(var + eps) * g.astype(f32) + b.astype(f32)

    def gelu(v):
        return v * jax.nn.sigmoid(1.702 * v)

    h = gelu(ln(xf, ln1_g, ln1_b) @ w_down.astype(f32) + b_down.astype(f32))
    y = gelu(ln(h, ln2_g, ln2_b) @ w_up.astype(f32) + b_up.astype(f32))
    return y + xf


if __name__ == "__main__":
    key = jax.random.PRNGKey(0)
    L, N, D = 8, 2, 32                  # (seq, batch, d_model); hidden = d_model // 4
    Hd = D // 4

    ks = jax.random.split(key, 9)
    x = jax.random.normal(ks[0], (L, N, D), dtype=jnp.float32)
    # PyTorch Linear weight is (out, in); store transposed (in, out) so kernel does x @ W^T.
    w_down = 0.1 * jax.random.normal(ks[1], (D, Hd), dtype=jnp.float32)
    b_down = 0.1 * jax.random.normal(ks[2], (Hd,), dtype=jnp.float32)
    w_up = 0.1 * jax.random.normal(ks[3], (Hd, D), dtype=jnp.float32)
    b_up = 0.1 * jax.random.normal(ks[4], (D,), dtype=jnp.float32)
    ln1_g = 1.0 + 0.1 * jax.random.normal(ks[5], (D,), dtype=jnp.float32)
    ln1_b = 0.1 * jax.random.normal(ks[6], (D,), dtype=jnp.float32)
    ln2_g = 1.0 + 0.1 * jax.random.normal(ks[7], (Hd,), dtype=jnp.float32)
    ln2_b = 0.1 * jax.random.normal(ks[8], (Hd,), dtype=jnp.float32)

    args = (ln1_g, ln1_b, w_down, b_down, ln2_g, ln2_b, w_up, b_up)

    ref = jax.block_until_ready(_reference(x, *args))

    # 1) Strict f32 path (f32 matmuls, exact divide) -- tight check of the semantics.
    out_strict = jax.block_until_ready(vit_residual_adapter(x, *args, strict=True))
    assert out_strict.shape == (L, N, D)
    assert bool(jnp.allclose(out_strict, ref, atol=1e-4, rtol=1e-4)), \
        "strict f32 mismatch vs reference"

    # 2) Default fast path (bf16 matmul inputs + approx reciprocal), f32 I/O.
    out_fast = jax.block_until_ready(vit_residual_adapter(x, *args))
    assert out_fast.shape == (L, N, D) and out_fast.dtype == jnp.float32
    assert bool(jnp.allclose(out_fast, ref, atol=5e-2, rtol=5e-2)), \
        "fast f32 path diverged from reference"

    # 3) bf16 I/O path (bf16 activations + bf16 epilogue; LN params stay f32).
    out_b = jax.block_until_ready(
        vit_residual_adapter(x.astype(jnp.bfloat16), *args))
    assert out_b.dtype == jnp.bfloat16 and out_b.shape == (L, N, D)
    assert bool(jnp.allclose(out_b.astype(jnp.float32), ref, atol=2e-1, rtol=5e-2)), \
        "bf16 path diverged from reference"

    print("KERNEL_OK")
</pallas_src>

<mosaic_0001>
module attributes {stable_mosaic.version = 11 : i64} {
  func.func @kernel(%arg0: i32, %arg1: memref<8x32xf32, #tpu.memory_space<vmem>>, %arg2: memref<1x32xf32, #tpu.memory_space<vmem>>, %arg3: memref<1x32xf32, #tpu.memory_space<vmem>>, %arg4: memref<32x8xf32, #tpu.memory_space<vmem>>, %arg5: memref<1x8xf32, #tpu.memory_space<vmem>>, %arg6: memref<1x8xf32, #tpu.memory_space<vmem>>, %arg7: memref<1x8xf32, #tpu.memory_space<vmem>>, %arg8: memref<8x32xf32, #tpu.memory_space<vmem>>, %arg9: memref<1x32xf32, #tpu.memory_space<vmem>>, %arg10: memref<8x32xf32, #tpu.memory_space<vmem>>) attributes {dimension_semantics = [#tpu.dimension_semantics<parallel>], iteration_bounds = array<i64: 2>, scalar_prefetch = 0 : i64, scratch_operands = 0 : i64, tpu.core_type = #tpu.core_type<tc>, window_params = [{transform_indices = @transform_0, window_bounds = array<i64: 8, 32>}, {pipeline_mode = #tpu.pipeline_mode<synchronous>, transform_indices = @transform_1, window_bounds = array<i64: 1, 32>}, {pipeline_mode = #tpu.pipeline_mode<synchronous>, transform_indices = @transform_2, window_bounds = array<i64: 1, 32>}, {pipeline_mode = #tpu.pipeline_mode<synchronous>, transform_indices = @transform_3, window_bounds = array<i64: 32, 8>}, {pipeline_mode = #tpu.pipeline_mode<synchronous>, transform_indices = @transform_4, window_bounds = array<i64: 1, 8>}, {pipeline_mode = #tpu.pipeline_mode<synchronous>, transform_indices = @transform_5, window_bounds = array<i64: 1, 8>}, {pipeline_mode = #tpu.pipeline_mode<synchronous>, transform_indices = @transform_6, window_bounds = array<i64: 1, 8>}, {pipeline_mode = #tpu.pipeline_mode<synchronous>, transform_indices = @transform_7, window_bounds = array<i64: 8, 32>}, {pipeline_mode = #tpu.pipeline_mode<synchronous>, transform_indices = @transform_8, window_bounds = array<i64: 1, 32>}, {transform_indices = @transform_9, window_bounds = array<i64: 8, 32>}]} {
    %c0 = arith.constant 0 : index
    %c0_0 = arith.constant 0 : index
    %0 = vector.load %arg1[%c0, %c0_0] : memref<8x32xf32, #tpu.memory_space<vmem>>, vector<8x32xf32>
    %c0_1 = arith.constant 0 : index
    %c0_2 = arith.constant 0 : index
    %1 = vector.load %arg2[%c0_1, %c0_2] : memref<1x32xf32, #tpu.memory_space<vmem>>, vector<1x32xf32>
    %c0_3 = arith.constant 0 : index
    %c0_4 = arith.constant 0 : index
    %2 = vector.load %arg3[%c0_3, %c0_4] : memref<1x32xf32, #tpu.memory_space<vmem>>, vector<1x32xf32>
    %cst = arith.constant dense<0.000000e+00> : vector<8xf32>
    %3 = vector.multi_reduction <add>, %0, %cst [1] : vector<8x32xf32> to vector<8xf32>
    %4 = vector.shape_cast %3 : vector<8xf32> to vector<8x1xf32>
    %cst_5 = arith.constant 3.200000e+01 : f32
    %5 = vector.broadcast %cst_5 : f32 to vector<8x1xf32>
    %6 = arith.divf %4, %5 : vector<8x1xf32>
    %7 = vector.broadcast %6 : vector<8x1xf32> to vector<8x32xf32>
    %8 = arith.subf %0, %7 : vector<8x32xf32>
    %9 = arith.mulf %8, %8 : vector<8x32xf32>
    %cst_6 = arith.constant dense<0.000000e+00> : vector<8xf32>
    %10 = vector.multi_reduction <add>, %9, %cst_6 [1] : vector<8x32xf32> to vector<8xf32>
    %11 = vector.shape_cast %10 : vector<8xf32> to vector<8x1xf32>
    %cst_7 = arith.constant 3.200000e+01 : f32
    %12 = vector.broadcast %cst_7 : f32 to vector<8x1xf32>
    %13 = arith.divf %11, %12 : vector<8x1xf32>
    %cst_8 = arith.constant 9.99999974E-6 : f32
    %14 = vector.broadcast %cst_8 : f32 to vector<8x1xf32>
    %15 = arith.addf %13, %14 : vector<8x1xf32>
    %16 = math.rsqrt %15 : vector<8x1xf32>
    %17 = vector.broadcast %16 : vector<8x1xf32> to vector<8x32xf32>
    %18 = arith.mulf %8, %17 : vector<8x32xf32>
    %19 = vector.broadcast %1 : vector<1x32xf32> to vector<8x32xf32>
    %20 = arith.mulf %18, %19 : vector<8x32xf32>
    %21 = vector.broadcast %2 : vector<1x32xf32> to vector<8x32xf32>
    %22 = arith.addf %20, %21 : vector<8x32xf32>
    %c0_9 = arith.constant 0 : index
    %c0_10 = arith.constant 0 : index
    %23 = vector.load %arg4[%c0_9, %c0_10] : memref<32x8xf32, #tpu.memory_space<vmem>>, vector<32x8xf32>
    %cst_11 = arith.constant dense<0.000000e+00> : vector<8x8xf32>
    %24 = tpu.matmul %22, %23, %cst_11 {dimension_numbers = #tpu.dot_dimension_numbers<[1], [0], [0], [1], [0, 0, 1, 1], [], []>} : vector<8x32xf32>, vector<32x8xf32>, vector<8x8xf32> -> vector<8x8xf32>
    %c0_12 = arith.constant 0 : index
    %c0_13 = arith.constant 0 : index
    %25 = vector.load %arg5[%c0_12, %c0_13] : memref<1x8xf32, #tpu.memory_space<vmem>>, vector<1x8xf32>
    %26 = vector.broadcast %25 : vector<1x8xf32> to vector<8x8xf32>
    %27 = arith.addf %24, %26 : vector<8x8xf32>
    %cst_14 = arith.constant 1.702000e+00 : f32
    %28 = vector.broadcast %cst_14 : f32 to vector<8x8xf32>
    %29 = arith.mulf %28, %27 : vector<8x8xf32>
    %30 = math.absf %29 : vector<8x8xf32>
    %cst_15 = arith.constant 0.000000e+00 : f32
    %31 = vector.broadcast %cst_15 : f32 to vector<8x8xf32>
    %32 = arith.subf %31, %30 : vector<8x8xf32>
    %33 = math.exp %32 : vector<8x8xf32>
    %cst_16 = arith.constant 0.000000e+00 : f32
    %34 = vector.broadcast %cst_16 : f32 to vector<8x8xf32>
    %35 = arith.cmpf oge, %29, %34 : vector<8x8xf32>
    %cst_17 = arith.constant 1.000000e+00 : f32
    %36 = vector.broadcast %cst_17 : f32 to vector<8x8xf32>
    %37 = arith.select %35, %36, %33 : vector<8x8xi1>, vector<8x8xf32>
    %cst_18 = arith.constant 1.000000e+00 : f32
    %38 = vector.broadcast %cst_18 : f32 to vector<8x8xf32>
    %39 = arith.addf %38, %33 : vector<8x8xf32>
    %40 = arith.divf %37, %39 : vector<8x8xf32>
    %41 = arith.mulf %27, %40 : vector<8x8xf32>
    %c0_19 = arith.constant 0 : index
    %c0_20 = arith.constant 0 : index
    %42 = vector.load %arg6[%c0_19, %c0_20] : memref<1x8xf32, #tpu.memory_space<vmem>>, vector<1x8xf32>
    %c0_21 = arith.constant 0 : index
    %c0_22 = arith.constant 0 : index
    %43 = vector.load %arg7[%c0_21, %c0_22] : memref<1x8xf32, #tpu.memory_space<vmem>>, vector<1x8xf32>
    %cst_23 = arith.constant dense<0.000000e+00> : vector<8xf32>
    %44 = vector.multi_reduction <add>, %41, %cst_23 [1] : vector<8x8xf32> to vector<8xf32>
    %45 = vector.shape_cast %44 : vector<8xf32> to vector<8x1xf32>
    %cst_24 = arith.constant 8.000000e+00 : f32
    %46 = vector.broadcast %cst_24 : f32 to vector<8x1xf32>
    %47 = arith.divf %45, %46 : vector<8x1xf32>
    %48 = vector.broadcast %47 : vector<8x1xf32> to vector<8x8xf32>
    %49 = arith.subf %41, %48 : vector<8x8xf32>
    %50 = arith.mulf %49, %49 : vector<8x8xf32>
    %cst_25 = arith.constant dense<0.000000e+00> : vector<8xf32>
    %51 = vector.multi_reduction <add>, %50, %cst_25 [1] : vector<8x8xf32> to vector<8xf32>
    %52 = vector.shape_cast %51 : vector<8xf32> to vector<8x1xf32>
    %cst_26 = arith.constant 8.000000e+00 : f32
    %53 = vector.broadcast %cst_26 : f32 to vector<8x1xf32>
    %54 = arith.divf %52, %53 : vector<8x1xf32>
    %cst_27 = arith.constant 9.99999974E-6 : f32
    %55 = vector.broadcast %cst_27 : f32 to vector<8x1xf32>
    %56 = arith.addf %54, %55 : vector<8x1xf32>
    %57 = math.rsqrt %56 : vector<8x1xf32>
    %58 = vector.broadcast %57 : vector<8x1xf32> to vector<8x8xf32>
    %59 = arith.mulf %49, %58 : vector<8x8xf32>
    %60 = vector.broadcast %42 : vector<1x8xf32> to vector<8x8xf32>
    %61 = arith.mulf %59, %60 : vector<8x8xf32>
    %62 = vector.broadcast %43 : vector<1x8xf32> to vector<8x8xf32>
    %63 = arith.addf %61, %62 : vector<8x8xf32>
    %c0_28 = arith.constant 0 : index
    %c0_29 = arith.constant 0 : index
    %64 = vector.load %arg8[%c0_28, %c0_29] : memref<8x32xf32, #tpu.memory_space<vmem>>, vector<8x32xf32>
    %cst_30 = arith.constant dense<0.000000e+00> : vector<8x32xf32>
    %65 = tpu.matmul %63, %64, %cst_30 {dimension_numbers = #tpu.dot_dimension_numbers<[1], [0], [0], [1], [0, 0, 1, 1], [], []>} : vector<8x8xf32>, vector<8x32xf32>, vector<8x32xf32> -> vector<8x32xf32>
    %c0_31 = arith.constant 0 : index
    %c0_32 = arith.constant 0 : index
    %66 = vector.load %arg9[%c0_31, %c0_32] : memref<1x32xf32, #tpu.memory_space<vmem>>, vector<1x32xf32>
    %67 = vector.broadcast %66 : vector<1x32xf32> to vector<8x32xf32>
    %68 = arith.addf %65, %67 : vector<8x32xf32>
    %cst_33 = arith.constant 1.702000e+00 : f32
    %69 = vector.broadcast %cst_33 : f32 to vector<8x32xf32>
    %70 = arith.mulf %69, %68 : vector<8x32xf32>
    %71 = math.absf %70 : vector<8x32xf32>
    %cst_34 = arith.constant 0.000000e+00 : f32
    %72 = vector.broadcast %cst_34 : f32 to vector<8x32xf32>
    %73 = arith.subf %72, %71 : vector<8x32xf32>
    %74 = math.exp %73 : vector<8x32xf32>
    %cst_35 = arith.constant 0.000000e+00 : f32
    %75 = vector.broadcast %cst_35 : f32 to vector<8x32xf32>
    %76 = arith.cmpf oge, %70, %75 : vector<8x32xf32>
    %cst_36 = arith.constant 1.000000e+00 : f32
    %77 = vector.broadcast %cst_36 : f32 to vector<8x32xf32>
    %78 = arith.select %76, %77, %74 : vector<8x32xi1>, vector<8x32xf32>
    %cst_37 = arith.constant 1.000000e+00 : f32
    %79 = vector.broadcast %cst_37 : f32 to vector<8x32xf32>
    %80 = arith.addf %79, %74 : vector<8x32xf32>
    %81 = arith.divf %78, %80 : vector<8x32xf32>
    %82 = arith.mulf %68, %81 : vector<8x32xf32>
    %83 = arith.addf %82, %0 : vector<8x32xf32>
    %c0_38 = arith.constant 0 : index
    %c0_39 = arith.constant 0 : index
    %84 = vector.load %arg10[%c0_38, %c0_39] : memref<8x32xf32, #tpu.memory_space<vmem>>, vector<8x32xf32>
    tpu.vector_store %arg10[%c0_38, %c0_39], %83 {strides = array<i32>} : memref<8x32xf32, #tpu.memory_space<vmem>>, vector<8x32xf32>,
    return
  }
  func.func @transform_0(%arg0: i32) -> (i32, i32) {
    %c0_i32 = arith.constant 0 : i32
    %c0_i32_0 = arith.constant 0 : i32
    return %arg0, %c0_i32 : i32, i32
  }
  func.func @transform_1(%arg0: i32) -> (i32, i32) {
    %c0_i32 = arith.constant 0 : i32
    %c0_i32_0 = arith.constant 0 : i32
    %c0_i32_1 = arith.constant 0 : i32
    return %c0_i32, %c0_i32_0 : i32, i32
  }
  func.func @transform_2(%arg0: i32) -> (i32, i32) {
    %c0_i32 = arith.constant 0 : i32
    %c0_i32_0 = arith.constant 0 : i32
    %c0_i32_1 = arith.constant 0 : i32
    return %c0_i32, %c0_i32_0 : i32, i32
  }
  func.func @transform_3(%arg0: i32) -> (i32, i32) {
    %c0_i32 = arith.constant 0 : i32
    %c0_i32_0 = arith.constant 0 : i32
    %c0_i32_1 = arith.constant 0 : i32
    return %c0_i32, %c0_i32_0 : i32, i32
  }
  func.func @transform_4(%arg0: i32) -> (i32, i32) {
    %c0_i32 = arith.constant 0 : i32
    %c0_i32_0 = arith.constant 0 : i32
    %c0_i32_1 = arith.constant 0 : i32
    return %c0_i32, %c0_i32_0 : i32, i32
  }
  func.func @transform_5(%arg0: i32) -> (i32, i32) {
    %c0_i32 = arith.constant 0 : i32
    %c0_i32_0 = arith.constant 0 : i32
    %c0_i32_1 = arith.constant 0 : i32
    return %c0_i32, %c0_i32_0 : i32, i32
  }
  func.func @transform_6(%arg0: i32) -> (i32, i32) {
    %c0_i32 = arith.constant 0 : i32
    %c0_i32_0 = arith.constant 0 : i32
    %c0_i32_1 = arith.constant 0 : i32
    return %c0_i32, %c0_i32_0 : i32, i32
  }
  func.func @transform_7(%arg0: i32) -> (i32, i32) {
    %c0_i32 = arith.constant 0 : i32
    %c0_i32_0 = arith.constant 0 : i32
    %c0_i32_1 = arith.constant 0 : i32
    return %c0_i32, %c0_i32_0 : i32, i32
  }
  func.func @transform_8(%arg0: i32) -> (i32, i32) {
    %c0_i32 = arith.constant 0 : i32
    %c0_i32_0 = arith.constant 0 : i32
    %c0_i32_1 = arith.constant 0 : i32
    return %c0_i32, %c0_i32_0 : i32, i32
  }
  func.func @transform_9(%arg0: i32) -> (i32, i32) {
    %c0_i32 = arith.constant 0 : i32
    %c0_i32_0 = arith.constant 0 : i32
    return %arg0, %c0_i32 : i32, i32
  }
}

</mosaic_0001>

<llo_original>
// kernel: tpu_custom_call.1
$region0: #{tpu_custom_call.1}
  #allocation0 [shape = 'u32[]', space=smem, size = 0x4, offset = 0x4, fixed_abs, tag = 'smem constant byte address 0x4 - core index']
  #allocation1 [shape = 'u32[144,128]{1,0:T(1,128)}', space=vmem, size = 0x12000, scoped, tag = 'internal scratch']
  %s0 = inlined_call_operand.vmem [shape: f32[16,32], index: 0, kind: input, shape index: {}]
  %s1 = inlined_call_operand.vmem [shape: f32[1,32], index: 1, kind: input, shape index: {}]
  %s2 = inlined_call_operand.vmem [shape: f32[1,32], index: 2, kind: input, shape index: {}]
  %s3 = inlined_call_operand.vmem [shape: f32[32,8], index: 3, kind: input, shape index: {}]
  %s4 = inlined_call_operand.vmem [shape: f32[1,8], index: 4, kind: input, shape index: {}]
  %s5 = inlined_call_operand.vmem [shape: f32[1,8], index: 5, kind: input, shape index: {}]
  %s6 = inlined_call_operand.vmem [shape: f32[1,8], index: 6, kind: input, shape index: {}]
  %s7 = inlined_call_operand.vmem [shape: f32[8,32], index: 7, kind: input, shape index: {}]
  %s8 = inlined_call_operand.vmem [shape: f32[1,32], index: 8, kind: input, shape index: {}]
  %s9 = inlined_call_operand.hbm [shape: f32[16,32], index: 9, kind: output, shape index: {}]
  %s10 = sld [smem:[#allocation0]]
  $region69: #{tpu_custom_call.1} parent=0
    _
  %s12 = ssub.s32 1, %s10
  %s13 = scalar_select 0, %s12, %s10
  $region1: #{tpu_custom_call.1} parent=0
    #allocation2 [shape = 'u8[8192]{0}', space=vmem, size = 0x2000, scoped, tag = 'output window, operand 0']
    #allocation3 [shape = 's32[2]{0}', space=sflag, size = 0x8, scoped, tag = 'scoped memory for tpu_custom_call.1']
    %14 = vsyncpa [#allocation3], 0
    %s15 = scalar_lea.sflag [#allocation3], 1
    %16 = vsyncpa %s15, 0
    loop: start=0, step=1, limit=4
    $region2: #{tpu_custom_call.1} parent=1 // loop_pre_header
      _
    $region3: #{tpu_custom_call.1} parent=1 // loop_header
      %s18 = sphi 0, %s22
      %p19 = scmp.ge.s32.totalorder %s18, 4
      %s28 = sphi 0, %s30
      %s31 = sphi 0, %s28
      %s32 = sphi 0, %s31
      %s48 = sphi 0, %s32
      %s52 = sphi 0, %s52
      %s54 = sphi 0, %s52
      %s55 = sphi 0, %s54
      %s69 = sphi 0, %s55
      %s73 = sphi 0, %s73
      %s75 = sphi 0, %s73
      %s76 = sphi 0, %s75
      %s90 = sphi 0, %s76
      %s94 = sphi 0, %s94
      %s96 = sphi 0, %s94
      %s97 = sphi 0, %s96
      %s111 = sphi 0, %s97
      %s115 = sphi 0, %s115
      %s117 = sphi 0, %s115
      %s118 = sphi 0, %s117
      %s132 = sphi 0, %s118
      %s136 = sphi 0, %s136
      %s138 = sphi 0, %s136
      %s139 = sphi 0, %s138
      %s153 = sphi 0, %s139
      %s157 = sphi 0, %s157
      %s159 = sphi 0, %s157
      %s160 = sphi 0, %s159
      %s174 = sphi 0, %s160
      %s178 = sphi 0, %s178
      %s180 = sphi 0, %s178
      %s181 = sphi 0, %s180
      %s195 = sphi 0, %s181
      %s199 = sphi 0, %s199
      %s201 = sphi 0, %s199
      %s202 = sphi 0, %s201
      %s216 = sphi 0, %s202
      %s222 = sphi 0, %s224
      %s225 = sphi 0, %s222
      %s226 = sphi 0, %s225
      %s242 = sphi 0, %s226
    $region4: #{tpu_custom_call.1} parent=1 // loop_header_branch
      %21 = sbr.rel (%p19) target = $region8
    $region5: #{tpu_custom_call.1} parent=1 // loop_body
      %s23 = ssub.s32 %s18, 1
      %s24 = ssub.s32 %s18, 2
      %s25 = sadd.s32 %s18, 1
      %s26 = ssub.s32 %s18, %s25
      %p27 = scmp.eq.s32.totalorder %s26, 0
      %s29 = sadd.s32 %s28, 1
      %s30 = scalar_select %p27, %s28, %s29
      %p33 = pneg %p27
      %p34 = scmp.eq.s32.totalorder %s18, 1
      %p35 = por %p33, %p34
      %p36 = scmp.ne.s32.totalorder %s28, %s31
      %p37 = scmp.eq.s32.totalorder %s18, 0
      %p38 = por %p36, %p37
      %p39 = scmp.ne.s32.totalorder %s28, %s31
      %p40 = scmp.eq.s32.totalorder %s23, 1
      %p41 = por %p39, %p40
      %p42 = scmp.ne.s32.totalorder %s31, %s32
      %p43 = scmp.eq.s32.totalorder %s23, 0
      %p44 = por %p42, %p43
      %p45 = scmp.ne.s32.totalorder %s31, %s32
      %p46 = scmp.eq.s32.totalorder %s24, 1
      %p47 = por %p45, %p46
      %p49 = scmp.ne.s32.totalorder %s32, %s48
      %p50 = scmp.eq.s32.totalorder %s24, 0
      %p51 = por %p49, %p50
      %s53 = sadd.s32 %s52, 1
      %p56 = scmp.eq.s32.totalorder %s18, 1
      %p57 = scmp.ne.s32.totalorder %s52, %s54
      %p58 = scmp.eq.s32.totalorder %s18, 0
      %p59 = por %p57, %p58
      %p60 = scmp.ne.s32.totalorder %s52, %s54
      %p61 = scmp.eq.s32.totalorder %s23, 1
      %p62 = por %p60, %p61
      %p63 = scmp.ne.s32.totalorder %s54, %s55
      %p64 = scmp.eq.s32.totalorder %s23, 0
      %p65 = por %p63, %p64
      %p66 = scmp.ne.s32.totalorder %s54, %s55
      %p67 = scmp.eq.s32.totalorder %s24, 1
      %p68 = por %p66, %p67
      %p70 = scmp.ne.s32.totalorder %s55, %s69
      %p71 = scmp.eq.s32.totalorder %s24, 0
      %p72 = por %p70, %p71
      %s74 = sadd.s32 %s73, 1
      %p77 = scmp.eq.s32.totalorder %s18, 1
      %p78 = scmp.ne.s32.totalorder %s73, %s75
      %p79 = scmp.eq.s32.totalorder %s18, 0
      %p80 = por %p78, %p79
      %p81 = scmp.ne.s32.totalorder %s73, %s75
      %p82 = scmp.eq.s32.totalorder %s23, 1
      %p83 = por %p81, %p82
      %p84 = scmp.ne.s32.totalorder %s75, %s76
      %p85 = scmp.eq.s32.totalorder %s23, 0
      %p86 = por %p84, %p85
      %p87 = scmp.ne.s32.totalorder %s75, %s76
      %p88 = scmp.eq.s32.totalorder %s24, 1
      %p89 = por %p87, %p88
      %p91 = scmp.ne.s32.totalorder %s76, %s90
      %p92 = scmp.eq.s32.totalorder %s24, 0
      %p93 = por %p91, %p92
      %s95 = sadd.s32 %s94, 1
      %p98 = scmp.eq.s32.totalorder %s18, 1
      %p99 = scmp.ne.s32.totalorder %s94, %s96
      %p100 = scmp.eq.s32.totalorder %s18, 0
      %p101 = por %p99, %p100
      %p102 = scmp.ne.s32.totalorder %s94, %s96
      %p103 = scmp.eq.s32.totalorder %s23, 1
      %p104 = por %p102, %p103
      %p105 = scmp.ne.s32.totalorder %s96, %s97
      %p106 = scmp.eq.s32.totalorder %s23, 0
      %p107 = por %p105, %p106
      %p108 = scmp.ne.s32.totalorder %s96, %s97
      %p109 = scmp.eq.s32.totalorder %s24, 1
      %p110 = por %p108, %p109
      %p112 = scmp.ne.s32.totalorder %s97, %s111
      %p113 = scmp.eq.s32.totalorder %s24, 0
      %p114 = por %p112, %p113
      %s116 = sadd.s32 %s115, 1
      %p119 = scmp.eq.s32.totalorder %s18, 1
      %p120 = scmp.ne.s32.totalorder %s115, %s117
      %p121 = scmp.eq.s32.totalorder %s18, 0
      %p122 = por %p120, %p121
      %p123 = scmp.ne.s32.totalorder %s115, %s117
      %p124 = scmp.eq.s32.totalorder %s23, 1
      %p125 = por %p123, %p124
      %p126 = scmp.ne.s32.totalorder %s117, %s118
      %p127 = scmp.eq.s32.totalorder %s23, 0
      %p128 = por %p126, %p127
      %p129 = scmp.ne.s32.totalorder %s117, %s118
      %p130 = scmp.eq.s32.totalorder %s24, 1
      %p131 = por %p129, %p130
      %p133 = scmp.ne.s32.totalorder %s118, %s132
      %p134 = scmp.eq.s32.totalorder %s24, 0
      %p135 = por %p133, %p134
      %s137 = sadd.s32 %s136, 1
      %p140 = scmp.eq.s32.totalorder %s18, 1
      %p141 = scmp.ne.s32.totalorder %s136, %s138
      %p142 = scmp.eq.s32.totalorder %s18, 0
      %p143 = por %p141, %p142
      %p144 = scmp.ne.s32.totalorder %s136, %s138
      %p145 = scmp.eq.s32.totalorder %s23, 1
      %p146 = por %p144, %p145
      %p147 = scmp.ne.s32.totalorder %s138, %s139
      %p148 = scmp.eq.s32.totalorder %s23, 0
      %p149 = por %p147, %p148
      %p150 = scmp.ne.s32.totalorder %s138, %s139
      %p151 = scmp.eq.s32.totalorder %s24, 1
      %p152 = por %p150, %p151
      %p154 = scmp.ne.s32.totalorder %s139, %s153
      %p155 = scmp.eq.s32.totalorder %s24, 0
      %p156 = por %p154, %p155
      %s158 = sadd.s32 %s157, 1
      %p161 = scmp.eq.s32.totalorder %s18, 1
      %p162 = scmp.ne.s32.totalorder %s157, %s159
      %p163 = scmp.eq.s32.totalorder %s18, 0
      %p164 = por %p162, %p163
      %p165 = scmp.ne.s32.totalorder %s157, %s159
      %p166 = scmp.eq.s32.totalorder %s23, 1
      %p167 = por %p165, %p166
      %p168 = scmp.ne.s32.totalorder %s159, %s160
      %p169 = scmp.eq.s32.totalorder %s23, 0
      %p170 = por %p168, %p169
      %p171 = scmp.ne.s32.totalorder %s159, %s160
      %p172 = scmp.eq.s32.totalorder %s24, 1
      %p173 = por %p171, %p172
      %p175 = scmp.ne.s32.totalorder %s160, %s174
      %p176 = scmp.eq.s32.totalorder %s24, 0
      %p177 = por %p175, %p176
      %s179 = sadd.s32 %s178, 1
      %p182 = scmp.eq.s32.totalorder %s18, 1
      %p183 = scmp.ne.s32.totalorder %s178, %s180
      %p184 = scmp.eq.s32.totalorder %s18, 0
      %p185 = por %p183, %p184
      %p186 = scmp.ne.s32.totalorder %s178, %s180
      %p187 = scmp.eq.s32.totalorder %s23, 1
      %p188 = por %p186, %p187
      %p189 = scmp.ne.s32.totalorder %s180, %s181
      %p190 = scmp.eq.s32.totalorder %s23, 0
      %p191 = por %p189, %p190
      %p192 = scmp.ne.s32.totalorder %s180, %s181
      %p193 = scmp.eq.s32.totalorder %s24, 1
      %p194 = por %p192, %p193
      %p196 = scmp.ne.s32.totalorder %s181, %s195
      %p197 = scmp.eq.s32.totalorder %s24, 0
      %p198 = por %p196, %p197
      %s200 = sadd.s32 %s199, 1
      %p203 = scmp.eq.s32.totalorder %s18, 1
      %p204 = scmp.ne.s32.totalorder %s199, %s201
      %p205 = scmp.eq.s32.totalorder %s18, 0
      %p206 = por %p204, %p205
      %p207 = scmp.ne.s32.totalorder %s199, %s201
      %p208 = scmp.eq.s32.totalorder %s23, 1
      %p209 = por %p207, %p208
      %p210 = scmp.ne.s32.totalorder %s201, %s202
      %p211 = scmp.eq.s32.totalorder %s23, 0
      %p212 = por %p210, %p211
      %p213 = scmp.ne.s32.totalorder %s201, %s202
      %p214 = scmp.eq.s32.totalorder %s24, 1
      %p215 = por %p213, %p214
      %p217 = scmp.ne.s32.totalorder %s202, %s216
      %p218 = scmp.eq.s32.totalorder %s24, 0
      %p219 = por %p217, %p218
      %s220 = ssub.s32 %s18, %s25
      %p221 = scmp.eq.s32.totalorder %s220, 0
      %s223 = sadd.s32 %s222, 1
      %s224 = scalar_select %p221, %s222, %s223
      %p227 = pneg %p221
      %p228 = scmp.eq.s32.totalorder %s18, 1
      %p229 = por %p227, %p228
      %p230 = scmp.ne.s32.totalorder %s222, %s225
      %p231 = scmp.eq.s32.totalorder %s18, 0
      %p232 = por %p230, %p231
      %p233 = scmp.ne.s32.totalorder %s222, %s225
      %p234 = scmp.eq.s32.totalorder %s23, 1
      %p235 = por %p233, %p234
      %p236 = scmp.ne.s32.totalorder %s225, %s226
      %p237 = scmp.eq.s32.totalorder %s23, 0
      %p238 = por %p236, %p237
      %p239 = scmp.ne.s32.totalorder %s225, %s226
      %p240 = scmp.eq.s32.totalorder %s24, 1
      %p241 = por %p239, %p240
      %p243 = scmp.ne.s32.totalorder %s226, %s242
      %p244 = scmp.eq.s32.totalorder %s24, 0
      %p245 = por %p243, %p244
      %p246 = scmp.le.s32.totalorder 1, %s18
      %p247 = scmp.lt.s32.totalorder %s18, 3
      %p248 = pnand %p246, %p247
      %p249 = pneg %p248
      // Predicated region
      $region9: #{tpu_custom_call.1} parent=5 // pred_check
        _
      $region10: #{tpu_custom_call.1} parent=5 // pred_check_branch
        %251 = sbr.rel (%p248) target = $region12
      $region11: #{tpu_custom_call.1} parent=5 // pred_region
        %s252 = ssub.s32 %s18, 1
        // Predicated region
        $region13: #{tpu_custom_call.1} parent=11 // pred_check
          %p253 = pneg %p65
        $region14: #{tpu_custom_call.1} parent=11 // pred_check_branch
          %255 = sbr.rel (%p253) target = $region16
        $region15: #{tpu_custom_call.1} parent=11 // pred_region
          _
        $region16: #{tpu_custom_call.1} parent=11 // pred_fallthru
          _
        // Predicated region
        $region17: #{tpu_custom_call.1} parent=11 // pred_check
          %p256 = pneg %p86
        $region18: #{tpu_custom_call.1} parent=11 // pred_check_branch
          %258 = sbr.rel (%p256) target = $region20
        $region19: #{tpu_custom_call.1} parent=11 // pred_region
          _
        $region20: #{tpu_custom_call.1} parent=11 // pred_fallthru
          _
        // Predicated region
        $region21: #{tpu_custom_call.1} parent=11 // pred_check
          %p259 = pneg %p107
        $region22: #{tpu_custom_call.1} parent=11 // pred_check_branch
          %261 = sbr.rel (%p259) target = $region24
        $region23: #{tpu_custom_call.1} parent=11 // pred_region
          _
        $region24: #{tpu_custom_call.1} parent=11 // pred_fallthru
          _
        // Predicated region
        $region25: #{tpu_custom_call.1} parent=11 // pred_check
          %p262 = pneg %p128
        $region26: #{tpu_custom_call.1} parent=11 // pred_check_branch
          %264 = sbr.rel (%p262) target = $region28
        $region27: #{tpu_custom_call.1} parent=11 // pred_region
          _
        $region28: #{tpu_custom_call.1} parent=11 // pred_fallthru
          _
        // Predicated region
        $region29: #{tpu_custom_call.1} parent=11 // pred_check
          %p265 = pneg %p149
        $region30: #{tpu_custom_call.1} parent=11 // pred_check_branch
          %267 = sbr.rel (%p265) target = $region32
        $region31: #{tpu_custom_call.1} parent=11 // pred_region
          _
        $region32: #{tpu_custom_call.1} parent=11 // pred_fallthru
          _
        // Predicated region
        $region33: #{tpu_custom_call.1} parent=11 // pred_check
          %p268 = pneg %p170
        $region34: #{tpu_custom_call.1} parent=11 // pred_check_branch
          %270 = sbr.rel (%p268) target = $region36
        $region35: #{tpu_custom_call.1} parent=11 // pred_region
          _
        $region36: #{tpu_custom_call.1} parent=11 // pred_fallthru
          _
        // Predicated region
        $region37: #{tpu_custom_call.1} parent=11 // pred_check
          %p271 = pneg %p191
        $region38: #{tpu_custom_call.1} parent=11 // pred_check_branch
          %273 = sbr.rel (%p271) target = $region40
        $region39: #{tpu_custom_call.1} parent=11 // pred_region
          _
        $region40: #{tpu_custom_call.1} parent=11 // pred_fallthru
          _
        // Predicated region
        $region41: #{tpu_custom_call.1} parent=11 // pred_check
          %p274 = pneg %p212
        $region42: #{tpu_custom_call.1} parent=11 // pred_check_branch
          %276 = sbr.rel (%p274) target = $region44
        $region43: #{tpu_custom_call.1} parent=11 // pred_region
          _
        $region44: #{tpu_custom_call.1} parent=11 // pred_fallthru
          _
      $region12: #{tpu_custom_call.1} parent=5 // pred_fallthru
        _
      %p277 = scmp.lt.s32.totalorder %s18, 2
      // Predicated region
      $region45: #{tpu_custom_call.1} parent=5 // pred_check
        %p278 = pneg %p277
      $region46: #{tpu_custom_call.1} parent=5 // pred_check_branch
        %280 = sbr.rel (%p278) target = $region48
      $region47: #{tpu_custom_call.1} parent=5 // pred_region
        // Predicated region
        $region49: #{tpu_custom_call.1} parent=47 // pred_check
          %p281 = pneg %p38
        $region50: #{tpu_custom_call.1} parent=47 // pred_check_branch
          %283 = sbr.rel (%p281) target = $region52
        $region51: #{tpu_custom_call.1} parent=47 // pred_region
          %p284 = scmp.lt.s32.totalorder %s18, 1
          %s285 = scalar_select %p284, %s18, 1
          %s286 = smul.addr %s285, 8
          %s287 = scalar_lea.vmem %s0, %s286
        $region52: #{tpu_custom_call.1} parent=47 // pred_fallthru
          _
      $region48: #{tpu_custom_call.1} parent=5 // pred_fallthru
        _
      %p288 = scmp.le.s32.totalorder 1, %s18
      %p289 = scmp.lt.s32.totalorder %s18, 3
      %p290 = pnand %p288, %p289
      %p291 = pneg %p290
      // Predicated region
      $region53: #{tpu_custom_call.1} parent=5 // pred_check
        _
      $region54: #{tpu_custom_call.1} parent=5 // pred_check_branch
        %293 = sbr.rel (%p290) target = $region56
      $region55: #{tpu_custom_call.1} parent=5 // pred_region
        %s294 = ssub.s32 %s18, 1
        %p295 = scmp.lt.s32.totalorder %s23, 1
        %s296 = scalar_select %p295, %s23, 1
        %s297 = smul.addr %s296, 8
        %s298 = scalar_lea.vmem %s0, %s297
        %p299 = pneg %p44
        %p300 = pneg %p41
        %p301 = pneg %p65
        %p302 = pneg %p62
        %p303 = pneg %p86
        %p304 = pneg %p83
        %p305 = pneg %p107
        %p306 = pneg %p104
        %p307 = pneg %p128
        %p308 = pneg %p125
        %p309 = pneg %p149
        %p310 = pneg %p146
        %p311 = pneg %p170
        %p312 = pneg %p167
        %p313 = pneg %p191
        %p314 = pneg %p188
        %p315 = pneg %p212
        %p316 = pneg %p209
        %p317 = pneg %p238
        %p318 = pneg %p235
        %s319 = sand.u32 %s225, 1
        %s320 = scalar_lea.sflag [#allocation3], %s319
        %s321 = sand.u32 %s225, 1
        %s322 = smul.addr %s321, 8
        %s323 = scalar_lea.vmem [#allocation2], %s322
        %p324 = scmp.lt.s32.totalorder %s23, 1
        %s325 = scalar_select %p324, %s23, 1
        %s326 = smul.addr %s325, 8
        %s327 = scalar_lea.vmem %s0, %s326
        %v328 = vld [vmem:[%s327] sm:$0xff]
        %v329 = vld [vmem:[%s1] sm:$0x1]
        %v330 = vld [vmem:[%s2] sm:$0x1]
        %vm331 = vcmask 261120
        %v332 = vsel %vm331, %v328, 0.0
        %333 = vadd.xlane.f32.xlu0 %v332
        %v334 = vpop.xlane.xlu0 %333
        %v335 = vrcp.pop 32.0
        %v336 = vmul.f32 %v334, %v335
        %v337 = vsub.f32 %v328, %v336
        %v338 = vmul.f32 %v337, %v337
        %v339 = vsel %vm331, %v338, 0.0
        %340 = vadd.xlane.f32.xlu0 %v339
        %v341 = vpop.xlane.xlu0 %340
        %v342 = vmul.f32 %v341, %v335
        %v343 = vadd.f32 %v342, 1e-05
        %v344 = vrsqrt.pop %v343
        %v345 = vmul.f32 %v337, %v344
        %v347 = vlaneseq
        %v348 = vshrl.u32 %v347, 7
        %v349 = vsub.s32 0, %v348
        %v350 = vrot.slane %v329, %v349
        %v352 = vmul.f32 %v345, %v350
        %v354 = vlaneseq
        %v355 = vshrl.u32 %v354, 7
        %v356 = vsub.s32 0, %v355
        %v357 = vrot.slane %v330, %v356
        %v359 = vadd.f32 %v352, %v357
        %v360 = vld [vmem:[%s3] sm:$0xff]
        %v361 = vld [vmem:[%s3 + $0x8] sm:$0xff]
        %v362 = vld [vmem:[%s3 + $0x10] sm:$0xff]
        %v363 = vld [vmem:[%s3 + $0x18] sm:$0xff]
        %v364 = vld [vmem:[%s4] sm:$0x1]
        %v366 = vlaneseq
        %v367 = vshrl.u32 %v366, 7
        %v368 = vsub.s32 0, %v367
        %v369 = vrot.slane %v364, %v368
        %v372 = vsel %vm331, %v359, 0
        %374 = vmatprep.subr.mxu0 0.0
        %375 = vmatpush1.msra.mxu0 %v360
        %376 = vmatprep.subr.mxu0 0.0
        %377 = vmatpush1.msra.mxu0 %v361
        %378 = vmatprep.subr.mxu0 0.0
        %379 = vmatpush1.msra.mxu0 %v362
        %380 = vmatprep.subr.mxu0 0.0
        %381 = vmatpush1.msra.mxu0 %v363
        %382 = vmatprep.subr.mxu0 0.0
        %383 = vmatpush1.msra.mxu0 0.0
        %384 = vmatprep.subr.mxu0 0.0
        %385 = vmatpush1.msra.mxu0 0.0
        %386 = vmatprep.subr.mxu0 0.0
        %387 = vmatpush1.msra.mxu0 0.0
        %388 = vmatprep.subr.mxu0 0.0
        %389 = vmatpush1.msra.mxu0 0.0
        %390 = vmatprep.subr.mxu0 0.0
        %391 = vmatpush1.msra.mxu0 0.0
        %392 = vmatprep.subr.mxu0 0.0
        %393 = vmatpush1.msra.mxu0 0.0
        %394 = vmatprep.subr.mxu0 0.0
        %395 = vmatpush1.msra.mxu0 0.0
        %396 = vmatprep.subr.mxu0 0.0
        %397 = vmatpush1.msra.mxu0 0.0
        %398 = vmatprep.subr.mxu0 0.0
        %399 = vmatpush1.msra.mxu0 0.0
        %400 = vmatprep.subr.mxu0 0.0
        %401 = vmatpush1.msra.mxu0 0.0
        %402 = vmatprep.subr.mxu0 0.0
        %403 = vmatpush1.msra.mxu0 0.0
        %404 = vmatprep.subr.mxu0 0.0
        %405 = vmatpush1.msra.mxu0 0.0
        %406 = vmatprep.subr.mxu0 0.0
        %407 = vmatpush1.msra.mxu0 0.0
        %408 = vmatprep.subr.mxu0 0.0
        %409 = vmatpush1.msra.mxu0 0.0
        %410 = vmatprep.subr.mxu0 0.0
        %411 = vmatpush1.msra.mxu0 0.0
        %412 = vmatprep.subr.mxu0 0.0
        %413 = vmatpush1.msra.mxu0 0.0
        %414 = vmatprep.subr.mxu0 0.0
        %415 = vmatpush1.msra.mxu0 0.0
        %416 = vmatprep.subr.mxu0 0.0
        %417 = vmatpush1.msra.mxu0 0.0
        %418 = vmatprep.subr.mxu0 0.0
        %419 = vmatpush1.msra.mxu0 0.0
        %420 = vmatprep.subr.mxu0 0.0
        %421 = vmatpush1.msra.mxu0 0.0
        %422 = vmatprep.subr.mxu0 0.0
        %423 = vmatpush1.msra.mxu0 0.0
        %424 = vmatprep.subr.mxu0 0.0
        %425 = vmatpush1.msra.mxu0 0.0
        %426 = vmatprep.subr.mxu0 0.0
        %427 = vmatpush1.msra.mxu0 0.0
        %428 = vmatprep.subr.mxu0 0.0
        %429 = vmatpush1.msra.mxu0 0.0
        %430 = vmatprep.subr.mxu0 0.0
        %431 = vmatpush1.msra.mxu0 0.0
        %432 = vmatprep.subr.mxu0 0.0
        %433 = vmatpush1.msra.mxu0 0.0
        %434 = vmatprep.subr.mxu0 0.0
        %435 = vmatpush1.msra.mxu0 0.0
        %436 = vmatprep.subr.mxu0 0.0
        %437 = vmatpush1.msra.mxu0 0.0
        %438 = vmatprep.mubr.f32.mxu0 0.0
        %439 = vmatmul.mubr.f32.gmra.mrb[0].mxu0 %v372
        %v440 = vpop.f32.mrb[0].mxu0
        %v441 = vadd.f32 %v369, %v440
        %v442 = vpop.f32.mrb[0].mxu0
        %443 = vdwg.mxu0
        %v444 = vmul.f32 %v441, 1.702
        %v445 = vand.u32 2147483647, %v444
        %v446 = vsub.f32 0.0, %v445
        %v447 = vmul.f32 %v446, 1.442695
        %v448 = vpow.pop %v447
        %vm449 = vcmp.ge.f32.partialorder %v444, 0.0
        %v450 = vsel %vm449, 1.0, %v448
        %v451 = vadd.f32 %v448, 1.0
        %v452 = vrcp.pop %v451
        %v453 = vmul.f32 %v450, %v452
        %v454 = vmul.f32 %v441, %v453
        %v455 = vld [vmem:[%s5] sm:$0x1]
        %v456 = vld [vmem:[%s6] sm:$0x1]
        %vm457 = vcmask 64512
        %v458 = vsel %vm457, %v454, 0.0
        %459 = vadd.xlane.f32.xlu0 %v458
        %v460 = vpop.xlane.xlu0 %459
        %v461 = vrcp.pop 8.0
        %v462 = vmul.f32 %v460, %v461
        %v463 = vsub.f32 %v454, %v462
        %v464 = vmul.f32 %v463, %v463
        %v465 = vsel %vm457, %v464, 0.0
        %466 = vadd.xlane.f32.xlu0 %v465
        %v467 = vpop.xlane.xlu0 %466
        %v468 = vmul.f32 %v467, %v461
        %v469 = vadd.f32 %v468, 1e-05
        %v470 = vrsqrt.pop %v469
        %v471 = vmul.f32 %v463, %v470
        %v473 = vlaneseq
        %v474 = vshrl.u32 %v473, 7
        %v475 = vsub.s32 0, %v474
        %v476 = vrot.slane %v455, %v475
        %v478 = vmul.f32 %v471, %v476
        %v480 = vlaneseq
        %v481 = vshrl.u32 %v480, 7
        %v482 = vsub.s32 0, %v481
        %v483 = vrot.slane %v456, %v482
        %v485 = vadd.f32 %v478, %v483
        %v486 = vld [vmem:[%s7] sm:$0xff]
        %v487 = vld [vmem:[%s8] sm:$0x1]
        %v489 = vlaneseq
        %v490 = vshrl.u32 %v489, 7
        %v491 = vsub.s32 0, %v490
        %v492 = vrot.slane %v487, %v491
        %v495 = vsel %vm457, %v485, 0
        %497 = vmatprep.subr.mxu0 0.0
        %498 = vmatpush1.msra.mxu0 %v486
        %499 = vmatprep.subr.mxu0 0.0
        %500 = vmatpush1.msra.mxu0 0.0
        %501 = vmatprep.subr.mxu0 0.0
        %502 = vmatpush1.msra.mxu0 0.0
        %503 = vmatprep.subr.mxu0 0.0
        %504 = vmatpush1.msra.mxu0 0.0
        %505 = vmatprep.subr.mxu0 0.0
        %506 = vmatpush1.msra.mxu0 0.0
        %507 = vmatprep.subr.mxu0 0.0
        %508 = vmatpush1.msra.mxu0 0.0
        %509 = vmatprep.subr.mxu0 0.0
        %510 = vmatpush1.msra.mxu0 0.0
        %511 = vmatprep.subr.mxu0 0.0
        %512 = vmatpush1.msra.mxu0 0.0
        %513 = vmatprep.subr.mxu0 0.0
        %514 = vmatpush1.msra.mxu0 0.0
        %515 = vmatprep.subr.mxu0 0.0
        %516 = vmatpush1.msra.mxu0 0.0
        %517 = vmatprep.subr.mxu0 0.0
        %518 = vmatpush1.msra.mxu0 0.0
        %519 = vmatprep.subr.mxu0 0.0
        %520 = vmatpush1.msra.mxu0 0.0
        %521 = vmatprep.subr.mxu0 0.0
        %522 = vmatpush1.msra.mxu0 0.0
        %523 = vmatprep.subr.mxu0 0.0
        %524 = vmatpush1.msra.mxu0 0.0
        %525 = vmatprep.subr.mxu0 0.0
        %526 = vmatpush1.msra.mxu0 0.0
        %527 = vmatprep.subr.mxu0 0.0
        %528 = vmatpush1.msra.mxu0 0.0
        %529 = vmatprep.subr.mxu0 0.0
        %530 = vmatpush1.msra.mxu0 0.0
        %531 = vmatprep.subr.mxu0 0.0
        %532 = vmatpush1.msra.mxu0 0.0
        %533 = vmatprep.subr.mxu0 0.0
        %534 = vmatpush1.msra.mxu0 0.0
        %535 = vmatprep.subr.mxu0 0.0
        %536 = vmatpush1.msra.mxu0 0.0
        %537 = vmatprep.subr.mxu0 0.0
        %538 = vmatpush1.msra.mxu0 0.0
        %539 = vmatprep.subr.mxu0 0.0
        %540 = vmatpush1.msra.mxu0 0.0
        %541 = vmatprep.subr.mxu0 0.0
        %542 = vmatpush1.msra.mxu0 0.0
        %543 = vmatprep.subr.mxu0 0.0
        %544 = vmatpush1.msra.mxu0 0.0
        %545 = vmatprep.subr.mxu0 0.0
        %546 = vmatpush1.msra.mxu0 0.0
        %547 = vmatprep.subr.mxu0 0.0
        %548 = vmatpush1.msra.mxu0 0.0
        %549 = vmatprep.subr.mxu0 0.0
        %550 = vmatpush1.msra.mxu0 0.0
        %551 = vmatprep.subr.mxu0 0.0
        %552 = vmatpush1.msra.mxu0 0.0
        %553 = vmatprep.subr.mxu0 0.0
        %554 = vmatpush1.msra.mxu0 0.0
        %555 = vmatprep.subr.mxu0 0.0
        %556 = vmatpush1.msra.mxu0 0.0
        %557 = vmatprep.subr.mxu0 0.0
        %558 = vmatpush1.msra.mxu0 0.0
        %559 = vmatprep.subr.mxu0 0.0
        %560 = vmatpush1.msra.mxu0 0.0
        %561 = vmatprep.mubr.f32.mxu0 0.0
        %562 = vmatmul.mubr.f32.gmra.mrb[0].mxu0 %v495
        %v563 = vpop.f32.mrb[0].mxu0
        %v564 = vadd.f32 %v492, %v563
        %v565 = vpop.f32.mrb[0].mxu0
        %566 = vdwg.mxu0
        %v567 = vmul.f32 %v564, 1.702
        %v568 = vand.u32 2147483647, %v567
        %v569 = vsub.f32 0.0, %v568
        %v570 = vmul.f32 %v569, 1.442695
        %v571 = vpow.pop %v570
        %vm572 = vcmp.ge.f32.partialorder %v567, 0.0
        %v573 = vsel %vm572, 1.0, %v571
        %v574 = vadd.f32 %v571, 1.0
        %v575 = vrcp.pop %v574
        %v576 = vmul.f32 %v573, %v575
        %v577 = vmul.f32 %v564, %v576
        %v578 = vadd.f32 %v577, %v328
        %579 = vst.msk [vmem:[%s323] sm:$0xff] %vm331, %v578
        %s580 = sand.u32 %s225, 1
        %s581 = scalar_lea.sflag [#allocation3], %s580
        %s582 = sand.u32 %s225, 1
        %s583 = smul.addr %s582, 8
        %s584 = scalar_lea.vmem [#allocation2], %s583
        // Predicated region
        $region57: #{tpu_custom_call.1} parent=55 // pred_check
          %p585 = pneg %p235
        $region58: #{tpu_custom_call.1} parent=55 // pred_check_branch
          %587 = sbr.rel (%p585) target = $region60
        $region59: #{tpu_custom_call.1} parent=55 // pred_region
          %s589 = ssub.s32 128, 128
          %590 = vsyncadd %s581, %s589
          %s591 = smul.addr %s23, 128
          %s592 = scalar_lea.hbm %s9, %s591
          %s594 = sshll.u32 %s584, 4
          %s595 = int_to_ptr.vmem [resolvable:$true] %s594
          %597 = dma.vmem_to_hbm [thread:$0]  %s595, 128, %s592, %s581
        $region60: #{tpu_custom_call.1} parent=55 // pred_fallthru
          _
      $region56: #{tpu_custom_call.1} parent=5 // pred_fallthru
        _
      %p598 = scmp.le.s32.totalorder 2, %s18
      // Predicated region
      $region61: #{tpu_custom_call.1} parent=5 // pred_check
        %p599 = pneg %p598
      $region62: #{tpu_custom_call.1} parent=5 // pred_check_branch
        %601 = sbr.rel (%p599) target = $region64
      $region63: #{tpu_custom_call.1} parent=5 // pred_region
        %s602 = ssub.s32 %s18, 2
        // Predicated region
        $region65: #{tpu_custom_call.1} parent=63 // pred_check
          %p603 = pneg %p241
        $region66: #{tpu_custom_call.1} parent=63 // pred_check_branch
          %605 = sbr.rel (%p603) target = $region68
        $region67: #{tpu_custom_call.1} parent=63 // pred_region
          %s606 = sand.u32 %s226, 1
          %s607 = scalar_lea.sflag [#allocation3], %s606
          %s608 = sand.u32 %s226, 1
          %s609 = smul.addr %s608, 8
          %s610 = scalar_lea.vmem [#allocation2], %s609
          %611 = dma.done %s607, 128
        $region68: #{tpu_custom_call.1} parent=63 // pred_fallthru
          _
      $region64: #{tpu_custom_call.1} parent=5 // pred_fallthru
        _
    $region6: #{tpu_custom_call.1} parent=1 // loop_footer
      %s22 = sadd.s32 1, %s18
    $region7: #{tpu_custom_call.1} parent=1 // loop_footer_branch
      %17 = sbr.rel target = $region3
    $region8: #{tpu_custom_call.1} parent=1 // loop_exit
      _
    %612 = vsyncpa [#allocation3], 1
    %s613 = scalar_lea.sflag [#allocation3], 1
    %614 = vsyncpa %s613, 1

</llo_original>
